<compile_context>
chip_gen: v7x
topology: tpu7x:2x2x1
jax: 0.10.0
libtpu: 0.0.40
codegen_flags: <defaults>
</compile_context>

<pallas_src>
import jax
import jax.numpy as jnp
from jax.experimental import pallas as pl
from jax.experimental.pallas import tpu as pltpu


# --------------------------------------------------------------------------- #
# Kernels
# --------------------------------------------------------------------------- #
def _fused_critic_kernel(s_ref, a_ref, w1s_ref, w1a_ref, b1_ref,
                         w2_ref, b2_ref, w3_ref, b3_ref, q1_ref, q2_ref):
    """Both Q heads in one pass; layer 1 computed jointly for the two heads."""
    wdt = w1s_ref.dtype
    H = w2_ref.shape[-1]
    s = s_ref[...].astype(wdt)          # cast once, shared by both heads
    a = a_ref[...].astype(wdt)

    # Layer 1 for BOTH heads (weights stacked along output dim):
    # 2 MXU pushes instead of 4 small-K pushes.
    h1 = (jnp.dot(s, w1s_ref[...], preferred_element_type=jnp.float32)
          + jnp.dot(a, w1a_ref[...], preferred_element_type=jnp.float32))
    h1 = jnp.maximum(h1 + b1_ref[...].astype(jnp.float32), 0.0)

    def head(idx, out_ref):
        h = h1[:, idx * H:(idx + 1) * H].astype(wdt)
        h2 = jnp.dot(h, w2_ref[idx], preferred_element_type=jnp.float32)
        h2 = jnp.maximum(h2 + b2_ref[idx:idx + 1, :].astype(jnp.float32), 0.0)
        # Final Linear(H, 1): VPU multiply + lane reduce (no 1-column MXU push).
        q = jnp.sum(h2 * w3_ref[idx:idx + 1, :].astype(jnp.float32),
                    axis=-1, keepdims=True)
        out_ref[...] = (q + b3_ref[idx]).astype(out_ref.dtype)

    head(0, q1_ref)
    head(1, q2_ref)


def _single_critic_kernel(s_ref, a_ref, w1s_ref, w1a_ref, b1_ref,
                          w2_ref, b2_ref, w3_ref, b3_ref, q1_ref):
    """use_double_q=False path: a single Q head."""
    wdt = w1s_ref.dtype
    s = s_ref[...].astype(wdt)
    a = a_ref[...].astype(wdt)
    h1 = (jnp.dot(s, w1s_ref[...], preferred_element_type=jnp.float32)
          + jnp.dot(a, w1a_ref[...], preferred_element_type=jnp.float32))
    h1 = jnp.maximum(h1 + b1_ref[...].astype(jnp.float32), 0.0)
    h2 = jnp.dot(h1.astype(wdt), w2_ref[...], preferred_element_type=jnp.float32)
    h2 = jnp.maximum(h2 + b2_ref[...].astype(jnp.float32), 0.0)
    q = jnp.sum(h2 * w3_ref[...].astype(jnp.float32), axis=-1, keepdims=True)
    q1_ref[...] = (q + b3_ref[0]).astype(q1_ref.dtype)


# --------------------------------------------------------------------------- #
# pallas_call wrapper
# --------------------------------------------------------------------------- #
def _round_up(x, m):
    return ((x + m - 1) // m) * m


def _batch_tile(batch):
    """Batch tile: multiple of 8, <= 512, and >= 2 grid steps whenever B >= 16
    so v7x's two TensorCores both get work (dimension_semantics='parallel')."""
    b8 = _round_up(max(batch, 8), 8)
    if b8 <= 8:
        return 8
    return min(512, _round_up(pl.cdiv(b8, 2), 8))


def _const_spec(w):
    """Constant index_map -> the block stays VMEM-resident across grid steps."""
    nd = w.ndim
    return pl.BlockSpec(w.shape, lambda i: (0,) * nd)


def _run_critic(state, action, vmem_params, b3, n_heads):
    """One pallas_call evaluating `n_heads` Q heads over a padded batch grid."""
    B, S = state.shape
    A = action.shape[1]
    H = vmem_params[3].shape[-1]          # W2 block: (2, H, H) or (H, H)

    TB = _batch_tile(B)
    Bp = _round_up(B, TB)
    if Bp != B:
        pad = Bp - B
        state = jnp.pad(state, ((0, pad), (0, 0)))
        action = jnp.pad(action, ((0, pad), (0, 0)))
    grid = (Bp // TB,)

    act_spec = lambda d: pl.BlockSpec((TB, d), lambda i: (i, 0))
    smem_spec = pl.BlockSpec(memory_space=pltpu.MemorySpace.SMEM)
    out_block = pl.BlockSpec((TB, 1), lambda i: (i, 0))

    if n_heads == 2:
        kernel = _fused_critic_kernel
        out_shape = (jax.ShapeDtypeStruct((Bp, 1), jnp.float32),
                     jax.ShapeDtypeStruct((Bp, 1), jnp.float32))
        out_specs = (out_block, out_block)
    else:
        kernel = _single_critic_kernel
        out_shape = jax.ShapeDtypeStruct((Bp, 1), jnp.float32)
        out_specs = out_block

    weight_bytes = sum(int(w.size) * w.dtype.itemsize for w in vmem_params)
    flops = 2 * Bp * n_heads * (S * H + A * H + H * H + H)
    bytes_accessed = int(Bp * (S + A + n_heads) * 4 + weight_bytes)
    # Weights (double-buffered) + activation/output tiles (double-buffered)
    # + f32 intermediates + slack; capped at v7x physical VMEM.
    vmem_limit = int(min(
        64 * 1024 * 1024,
        2 * weight_bytes
        + 4 * TB * (S + A + n_heads) * 4
        + 8 * TB * max(2 * H, 256) * 4
        + (8 << 20)))

    outs = pl.pallas_call(
        kernel,
        out_shape=out_shape,
        grid=grid,
        in_specs=[act_spec(S), act_spec(A)]
                 + [_const_spec(w) for w in vmem_params] + [smem_spec],
        out_specs=out_specs,
        compiler_params=pltpu.CompilerParams(
            dimension_semantics=("parallel",),
            vmem_limit_bytes=vmem_limit),
        cost_estimate=pl.CostEstimate(
            flops=flops, transcendentals=0, bytes_accessed=bytes_accessed),
    )(state, action, *vmem_params, b3)

    if n_heads == 2:
        q1, q2 = outs
        return q1[:B], q2[:B]
    return outs[:B], None


# --------------------------------------------------------------------------- #
# Parameter init (PyTorch nn.Linear default: U(-1/sqrt(fan_in), 1/sqrt(fan_in)))
# --------------------------------------------------------------------------- #
def _init_linear(key, fan_in, fan_out, dtype):
    kw, kb = jax.random.split(key)
    bound = 1.0 / float(fan_in) ** 0.5
    w = jax.random.uniform(kw, (fan_in, fan_out), jnp.float32, -bound, bound)
    b = jax.random.uniform(kb, (1, fan_out), jnp.float32, -bound, bound)
    return w.astype(dtype), b.astype(dtype)


def _init_head(key, state_dim, action_dim, hidden_dim, dtype):
    k1, k2, k3 = jax.random.split(key, 3)
    w1, b1 = _init_linear(k1, state_dim + action_dim, hidden_dim, dtype)
    w2, b2 = _init_linear(k2, hidden_dim, hidden_dim, dtype)
    w3, b3 = _init_linear(k3, hidden_dim, 1, dtype)
    # torch.cat([state, action]) is folded into the kernel by splitting W1;
    # the final Linear(H, 1) weight is stored as a row for the VPU reduce.
    return dict(w1s=w1[:state_dim], w1a=w1[state_dim:], b1=b1,
                w2=w2, b2=b2, w3=w3.T, b3=b3)


class CriticModelPallas:
    """JAX/Pallas equivalent of the PyTorch TD3 CriticModel forward pass."""

    def __init__(self, state_dim, action_dim, hidden_dim, use_double_q=True,
                 seed=0, param_dtype=jnp.float32):
        # param_dtype=jnp.bfloat16 -> bf16 MXU operands and half the weight DMA
        # bytes on v6e/v7x (f32 accumulation kept); default f32 matches the
        # PyTorch reference numerics exactly.
        self.state_dim = state_dim
        self.action_dim = action_dim
        self.hidden_dim = hidden_dim
        self.use_double_q = use_double_q
        self.param_dtype = param_dtype
        self.n_heads = 2 if use_double_q else 1

        key = jax.random.PRNGKey(seed)
        k1, k2 = jax.random.split(key)
        heads = [_init_head(k1, state_dim, action_dim, hidden_dim, param_dtype)]
        if use_double_q:
            heads.append(_init_head(k2, state_dim, action_dim, hidden_dim,
                                    param_dtype))
        self._heads = heads

        # Pack parameters: stacked layer-1 weights (fused per-head matmuls),
        # stacked W2 / b2 / w3, scalar biases in one SMEM array.
        if use_double_q:
            ha, hb = heads
            self._vmem_params = (
                jnp.concatenate([ha["w1s"], hb["w1s"]], axis=1),   # (S, 2H)
                jnp.concatenate([ha["w1a"], hb["w1a"]], axis=1),   # (A, 2H)
                jnp.concatenate([ha["b1"], hb["b1"]], axis=1),     # (1, 2H)
                jnp.stack([ha["w2"], hb["w2"]], axis=0),           # (2, H, H)
                jnp.concatenate([ha["b2"], hb["b2"]], axis=0),     # (2, H)
                jnp.concatenate([ha["w3"], hb["w3"]], axis=0),     # (2, H)
            )
            self._b3 = jnp.concatenate(
                [ha["b3"].reshape(-1), hb["b3"].reshape(-1)]).astype(jnp.float32)
        else:
            ha = heads[0]
            self._vmem_params = (ha["w1s"], ha["w1a"], ha["b1"],
                                 ha["w2"], ha["b2"], ha["w3"])
            self._b3 = ha["b3"].reshape(-1).astype(jnp.float32)

    def head_params(self, idx):
        """Unpacked per-head parameters (reference / testing)."""
        h = self._heads[idx]
        return (h["w1s"], h["w1a"], h["b1"], h["w2"], h["b2"], h["w3"], h["b3"])

    def forward(self, state, action):
        state = jnp.asarray(state, jnp.float32)
        action = jnp.asarray(action, jnp.float32)
        q1, q2 = _run_critic(state, action, self._vmem_params, self._b3,
                             self.n_heads)
        if self.use_double_q:
            return q1, q2
        return q1, q1

    __call__ = forward
    get_value = forward


# --------------------------------------------------------------------------- #
# Pure-JAX reference
# --------------------------------------------------------------------------- #
def _ref_head(state, action, head_params, operand_dtype=jnp.float32):
    """`operand_dtype` emulates the kernel's MXU-operand cast (bf16 path)."""
    w1s, w1a, b1, w2, b2, w3, b3 = [jnp.asarray(p, jnp.float32)
                                    for p in head_params]
    cast = lambda x: x.astype(operand_dtype).astype(jnp.float32)
    s = jnp.asarray(state, jnp.float32)
    a = jnp.asarray(action, jnp.float32)
    h1 = jnp.maximum(cast(s) @ w1s + cast(a) @ w1a + b1, 0.0)
    h2 = jnp.maximum(cast(h1) @ w2 + b2, 0.0)
    return jnp.sum(h2 * w3, axis=-1, keepdims=True) + b3


# --------------------------------------------------------------------------- #
# Self-test
# --------------------------------------------------------------------------- #
if __name__ == "__main__":
    # Small deterministic config: state_dim=12, action_dim=4, hidden_dim=32.
    B, S, A, H = 8, 12, 4, 32
    key = jax.random.PRNGKey(0)
    ks, ka = jax.random.split(key)
    state = jax.random.normal(ks, (B, S), jnp.float32)
    action = jax.random.normal(ka, (B, A), jnp.float32)

    # --- double-Q, f32 params (matches PyTorch numerics) ---------------------
    critic = CriticModelPallas(S, A, H, use_double_q=True, seed=0)
    q1, q2 = critic(state, action)
    jax.block_until_ready((q1, q2))
    r1 = _ref_head(state, action, critic.head_params(0))
    r2 = _ref_head(state, action, critic.head_params(1))
    assert q1.shape == (B, 1) and q2.shape == (B, 1)
    assert jnp.allclose(q1, r1, atol=1e-4, rtol=1e-4), "q1 mismatch"
    assert jnp.allclose(q2, r2, atol=1e-4, rtol=1e-4), "q2 mismatch"

    # --- use_double_q=False (single head, returns (q1, q1)) ------------------
    critic_s = CriticModelPallas(S, A, H, use_double_q=False, seed=1)
    s1, s2 = critic_s(state, action)
    jax.block_until_ready((s1, s2))
    assert jnp.allclose(s1, _ref_head(state, action, critic_s.head_params(0)),
                        atol=1e-4, rtol=1e-4), "single-q mismatch"
    assert jnp.allclose(s1, s2)

    # --- ragged batch (exercises wrapper padding + grid > 1) -----------------
    B2 = 100
    k2s, k2a = jax.random.split(jax.random.PRNGKey(2))
    state2 = jax.random.normal(k2s, (B2, S), jnp.float32)
    action2 = jax.random.normal(k2a, (B2, A), jnp.float32)
    g1, g2 = critic(state2, action2)
    jax.block_until_ready((g1, g2))
    assert g1.shape == (B2, 1) and g2.shape == (B2, 1)
    assert jnp.allclose(g1, _ref_head(state2, action2, critic.head_params(0)),
                        atol=1e-4, rtol=1e-4), "ragged q1 mismatch"
    assert jnp.allclose(g2, _ref_head(state2, action2, critic.head_params(1)),
                        atol=1e-4, rtol=1e-4), "ragged q2 mismatch"

    # --- large batch, 2 grid steps of 512 rows (v7x dual-TC path) ------------
    B3 = 1024
    k3s, k3a = jax.random.split(jax.random.PRNGKey(3))
    state3 = jax.random.normal(k3s, (B3, S), jnp.float32)
    action3 = jax.random.normal(k3a, (B3, A), jnp.float32)
    l1, l2 = critic(state3, action3)
    jax.block_until_ready((l1, l2))
    assert jnp.allclose(l1, _ref_head(state3, action3, critic.head_params(0)),
                        atol=1e-4, rtol=1e-4), "large-batch q1 mismatch"
    assert jnp.allclose(l2, _ref_head(state3, action3, critic.head_params(1)),
                        atol=1e-4, rtol=1e-4), "large-batch q2 mismatch"

    # --- bf16 params (bf16 MXU operands, f32 accumulation): looser tolerance -
    critic_bf = CriticModelPallas(S, A, H, use_double_q=True, seed=4,
                                  param_dtype=jnp.bfloat16)
    bq1, bq2 = critic_bf(state, action)
    jax.block_until_ready((bq1, bq2))
    rb1 = _ref_head(state, action, critic_bf.head_params(0), jnp.bfloat16)
    rb2 = _ref_head(state, action, critic_bf.head_params(1), jnp.bfloat16)
    assert jnp.allclose(bq1, rb1, atol=2e-2, rtol=2e-2), "bf16 q1 mismatch"
    assert jnp.allclose(bq2, rb2, atol=2e-2, rtol=2e-2), "bf16 q2 mismatch"

    print("KERNEL_OK")
</pallas_src>

<mosaic_0001>
module attributes {stable_mosaic.version = 11 : i64} {
  func.func @_fused_critic_kernel(%arg0: i32, %arg1: memref<8x12xf32, #tpu.memory_space<vmem>>, %arg2: memref<8x4xf32, #tpu.memory_space<vmem>>, %arg3: memref<12x64xf32, #tpu.memory_space<vmem>>, %arg4: memref<4x64xf32, #tpu.memory_space<vmem>>, %arg5: memref<1x64xf32, #tpu.memory_space<vmem>>, %arg6: memref<2x32x32xf32, #tpu.memory_space<vmem>>, %arg7: memref<2x32xf32, #tpu.memory_space<vmem>>, %arg8: memref<2x32xf32, #tpu.memory_space<vmem>>, %arg9: memref<2xf32, #tpu.memory_space<smem>>, %arg10: memref<8x1xf32, #tpu.memory_space<vmem>>, %arg11: memref<8x1xf32, #tpu.memory_space<vmem>>) attributes {dimension_semantics = [#tpu.dimension_semantics<parallel>], iteration_bounds = array<i64: 1>, scalar_prefetch = 0 : i64, scratch_operands = 0 : i64, tpu.core_type = #tpu.core_type<tc>, window_params = [{transform_indices = @transform_0, window_bounds = array<i64: 8, 12>}, {transform_indices = @transform_1, window_bounds = array<i64: 8, 4>}, {pipeline_mode = #tpu.pipeline_mode<synchronous>, transform_indices = @transform_2, window_bounds = array<i64: 12, 64>}, {pipeline_mode = #tpu.pipeline_mode<synchronous>, transform_indices = @transform_3, window_bounds = array<i64: 4, 64>}, {pipeline_mode = #tpu.pipeline_mode<synchronous>, transform_indices = @transform_4, window_bounds = array<i64: 1, 64>}, {pipeline_mode = #tpu.pipeline_mode<synchronous>, transform_indices = @transform_5, window_bounds = array<i64: 2, 32, 32>}, {pipeline_mode = #tpu.pipeline_mode<synchronous>, transform_indices = @transform_6, window_bounds = array<i64: 2, 32>}, {pipeline_mode = #tpu.pipeline_mode<synchronous>, transform_indices = @transform_7, window_bounds = array<i64: 2, 32>}, {transform_indices = @transform_8, window_bounds = array<i64: 2>}, {transform_indices = @transform_9, window_bounds = array<i64: 8, 1>}, {transform_indices = @transform_10, window_bounds = array<i64: 8, 1>}]} {
    %c0 = arith.constant 0 : index
    %c0_0 = arith.constant 0 : index
    %0 = vector.load %arg1[%c0, %c0_0] : memref<8x12xf32, #tpu.memory_space<vmem>>, vector<8x12xf32>
    %c0_1 = arith.constant 0 : index
    %c0_2 = arith.constant 0 : index
    %1 = vector.load %arg2[%c0_1, %c0_2] : memref<8x4xf32, #tpu.memory_space<vmem>>, vector<8x4xf32>
    %c0_3 = arith.constant 0 : index
    %c0_4 = arith.constant 0 : index
    %2 = vector.load %arg3[%c0_3, %c0_4] : memref<12x64xf32, #tpu.memory_space<vmem>>, vector<12x64xf32>
    %cst = arith.constant dense<0.000000e+00> : vector<8x64xf32>
    %3 = tpu.matmul %0, %2, %cst {dimension_numbers = #tpu.dot_dimension_numbers<[1], [0], [0], [1], [0, 0, 1, 1], [], []>} : vector<8x12xf32>, vector<12x64xf32>, vector<8x64xf32> -> vector<8x64xf32>
    %c0_5 = arith.constant 0 : index
    %c0_6 = arith.constant 0 : index
    %4 = vector.load %arg4[%c0_5, %c0_6] : memref<4x64xf32, #tpu.memory_space<vmem>>, vector<4x64xf32>
    %cst_7 = arith.constant dense<0.000000e+00> : vector<8x64xf32>
    %5 = tpu.matmul %1, %4, %cst_7 {dimension_numbers = #tpu.dot_dimension_numbers<[1], [0], [0], [1], [0, 0, 1, 1], [], []>} : vector<8x4xf32>, vector<4x64xf32>, vector<8x64xf32> -> vector<8x64xf32>
    %6 = arith.addf %3, %5 : vector<8x64xf32>
    %c0_8 = arith.constant 0 : index
    %c0_9 = arith.constant 0 : index
    %7 = vector.load %arg5[%c0_8, %c0_9] : memref<1x64xf32, #tpu.memory_space<vmem>>, vector<1x64xf32>
    %8 = vector.broadcast %7 : vector<1x64xf32> to vector<8x64xf32>
    %9 = arith.addf %6, %8 : vector<8x64xf32>
    %cst_10 = arith.constant 0.000000e+00 : f32
    %10 = vector.broadcast %cst_10 : f32 to vector<8x64xf32>
    %11 = arith.maximumf %9, %10 : vector<8x64xf32>
    %12 = vector.extract_strided_slice %11 {offsets = [0, 0], sizes = [8, 32], strides = [1, 1]} : vector<8x64xf32> to vector<8x32xf32>
    %c0_11 = arith.constant 0 : index
    %c0_12 = arith.constant 0 : index
    %c0_13 = arith.constant 0 : index
    %13 = vector.load %arg6[%c0_11, %c0_12, %c0_13] : memref<2x32x32xf32, #tpu.memory_space<vmem>>, vector<1x32x32xf32>
    %14 = vector.shape_cast %13 : vector<1x32x32xf32> to vector<32x32xf32>
    %cst_14 = arith.constant dense<0.000000e+00> : vector<8x32xf32>
    %15 = tpu.matmul %12, %14, %cst_14 {dimension_numbers = #tpu.dot_dimension_numbers<[1], [0], [0], [1], [0, 0, 1, 1], [], []>} : vector<8x32xf32>, vector<32x32xf32>, vector<8x32xf32> -> vector<8x32xf32>
    %c0_15 = arith.constant 0 : index
    %c0_16 = arith.constant 0 : index
    %16 = vector.load %arg7[%c0_15, %c0_16] : memref<2x32xf32, #tpu.memory_space<vmem>>, vector<1x32xf32>
    %17 = vector.broadcast %16 : vector<1x32xf32> to vector<8x32xf32>
    %18 = arith.addf %15, %17 : vector<8x32xf32>
    %cst_17 = arith.constant 0.000000e+00 : f32
    %19 = vector.broadcast %cst_17 : f32 to vector<8x32xf32>
    %20 = arith.maximumf %18, %19 : vector<8x32xf32>
    %c0_18 = arith.constant 0 : index
    %c0_19 = arith.constant 0 : index
    %21 = vector.load %arg8[%c0_18, %c0_19] : memref<2x32xf32, #tpu.memory_space<vmem>>, vector<1x32xf32>
    %22 = vector.broadcast %21 : vector<1x32xf32> to vector<8x32xf32>
    %23 = arith.mulf %20, %22 : vector<8x32xf32>
    %cst_20 = arith.constant dense<0.000000e+00> : vector<8xf32>
    %24 = vector.multi_reduction <add>, %23, %cst_20 [1] : vector<8x32xf32> to vector<8xf32>
    %25 = vector.shape_cast %24 : vector<8xf32> to vector<8x1xf32>
    %c0_21 = arith.constant 0 : index
    %26 = memref.load %arg9[%c0_21] : memref<2xf32, #tpu.memory_space<smem>>
    %27 = vector.broadcast %26 : f32 to vector<8x1xf32>
    %28 = arith.addf %25, %27 : vector<8x1xf32>
    %c0_22 = arith.constant 0 : index
    %c0_23 = arith.constant 0 : index
    %29 = vector.load %arg10[%c0_22, %c0_23] : memref<8x1xf32, #tpu.memory_space<vmem>>, vector<8x1xf32>
    tpu.vector_store %arg10[%c0_22, %c0_23], %28 {strides = array<i32>} : memref<8x1xf32, #tpu.memory_space<vmem>>, vector<8x1xf32>,
    %30 = vector.extract_strided_slice %11 {offsets = [0, 32], sizes = [8, 32], strides = [1, 1]} : vector<8x64xf32> to vector<8x32xf32>
    %c1 = arith.constant 1 : index
    %c0_24 = arith.constant 0 : index
    %c0_25 = arith.constant 0 : index
    %31 = vector.load %arg6[%c1, %c0_24, %c0_25] : memref<2x32x32xf32, #tpu.memory_space<vmem>>, vector<1x32x32xf32>
    %32 = vector.shape_cast %31 : vector<1x32x32xf32> to vector<32x32xf32>
    %cst_26 = arith.constant dense<0.000000e+00> : vector<8x32xf32>
    %33 = tpu.matmul %30, %32, %cst_26 {dimension_numbers = #tpu.dot_dimension_numbers<[1], [0], [0], [1], [0, 0, 1, 1], [], []>} : vector<8x32xf32>, vector<32x32xf32>, vector<8x32xf32> -> vector<8x32xf32>
    %c1_27 = arith.constant 1 : index
    %c0_28 = arith.constant 0 : index
    %34 = vector.load %arg7[%c1_27, %c0_28] : memref<2x32xf32, #tpu.memory_space<vmem>>, vector<1x32xf32>
    %35 = vector.broadcast %34 : vector<1x32xf32> to vector<8x32xf32>
    %36 = arith.addf %33, %35 : vector<8x32xf32>
    %cst_29 = arith.constant 0.000000e+00 : f32
    %37 = vector.broadcast %cst_29 : f32 to vector<8x32xf32>
    %38 = arith.maximumf %36, %37 : vector<8x32xf32>
    %c1_30 = arith.constant 1 : index
    %c0_31 = arith.constant 0 : index
    %39 = vector.load %arg8[%c1_30, %c0_31] : memref<2x32xf32, #tpu.memory_space<vmem>>, vector<1x32xf32>
    %40 = vector.broadcast %39 : vector<1x32xf32> to vector<8x32xf32>
    %41 = arith.mulf %38, %40 : vector<8x32xf32>
    %cst_32 = arith.constant dense<0.000000e+00> : vector<8xf32>
    %42 = vector.multi_reduction <add>, %41, %cst_32 [1] : vector<8x32xf32> to vector<8xf32>
    %43 = vector.shape_cast %42 : vector<8xf32> to vector<8x1xf32>
    %c1_33 = arith.constant 1 : index
    %44 = memref.load %arg9[%c1_33] : memref<2xf32, #tpu.memory_space<smem>>
    %45 = vector.broadcast %44 : f32 to vector<8x1xf32>
    %46 = arith.addf %43, %45 : vector<8x1xf32>
    %c0_34 = arith.constant 0 : index
    %c0_35 = arith.constant 0 : index
    %47 = vector.load %arg11[%c0_34, %c0_35] : memref<8x1xf32, #tpu.memory_space<vmem>>, vector<8x1xf32>
    tpu.vector_store %arg11[%c0_34, %c0_35], %46 {strides = array<i32>} : memref<8x1xf32, #tpu.memory_space<vmem>>, vector<8x1xf32>,
    return
  }
  func.func @transform_0(%arg0: i32) -> (i32, i32) {
    %c0_i32 = arith.constant 0 : i32
    %c0_i32_0 = arith.constant 0 : i32
    return %arg0, %c0_i32 : i32, i32
  }
  func.func @transform_1(%arg0: i32) -> (i32, i32) {
    %c0_i32 = arith.constant 0 : i32
    %c0_i32_0 = arith.constant 0 : i32
    return %arg0, %c0_i32 : i32, i32
  }
  func.func @transform_2(%arg0: i32) -> (i32, i32) {
    %c0_i32 = arith.constant 0 : i32
    %c0_i32_0 = arith.constant 0 : i32
    %c0_i32_1 = arith.constant 0 : i32
    return %c0_i32, %c0_i32_0 : i32, i32
  }
  func.func @transform_3(%arg0: i32) -> (i32, i32) {
    %c0_i32 = arith.constant 0 : i32
    %c0_i32_0 = arith.constant 0 : i32
    %c0_i32_1 = arith.constant 0 : i32
    return %c0_i32, %c0_i32_0 : i32, i32
  }
  func.func @transform_4(%arg0: i32) -> (i32, i32) {
    %c0_i32 = arith.constant 0 : i32
    %c0_i32_0 = arith.constant 0 : i32
    %c0_i32_1 = arith.constant 0 : i32
    return %c0_i32, %c0_i32_0 : i32, i32
  }
  func.func @transform_5(%arg0: i32) -> (i32, i32, i32) {
    %c0_i32 = arith.constant 0 : i32
    %c0_i32_0 = arith.constant 0 : i32
    %c0_i32_1 = arith.constant 0 : i32
    %c0_i32_2 = arith.constant 0 : i32
    return %c0_i32, %c0_i32_0, %c0_i32_1 : i32, i32, i32
  }
  func.func @transform_6(%arg0: i32) -> (i32, i32) {
    %c0_i32 = arith.constant 0 : i32
    %c0_i32_0 = arith.constant 0 : i32
    %c0_i32_1 = arith.constant 0 : i32
    return %c0_i32, %c0_i32_0 : i32, i32
  }
  func.func @transform_7(%arg0: i32) -> (i32, i32) {
    %c0_i32 = arith.constant 0 : i32
    %c0_i32_0 = arith.constant 0 : i32
    %c0_i32_1 = arith.constant 0 : i32
    return %c0_i32, %c0_i32_0 : i32, i32
  }
  func.func @transform_8(%arg0: i32) -> i32 {
    %c0_i32 = arith.constant 0 : i32
    %c0_i32_0 = arith.constant 0 : i32
    return %c0_i32 : i32
  }
  func.func @transform_9(%arg0: i32) -> (i32, i32) {
    %c0_i32 = arith.constant 0 : i32
    %c0_i32_0 = arith.constant 0 : i32
    return %arg0, %c0_i32 : i32, i32
  }
  func.func @transform_10(%arg0: i32) -> (i32, i32) {
    %c0_i32 = arith.constant 0 : i32
    %c0_i32_0 = arith.constant 0 : i32
    return %arg0, %c0_i32 : i32, i32
  }
}

</mosaic_0001>

<llo_original>
// kernel: tpu_custom_call.1
$region0: #{tpu_custom_call.1}
  #allocation0 [shape = 'u32[]', space=smem, size = 0x4, offset = 0x4, fixed_abs, tag = 'smem constant byte address 0x4 - core index']
  #allocation1 [shape = 'u32[144,128]{1,0:T(1,128)}', space=vmem, size = 0x12000, scoped, tag = 'internal scratch']
  %s0 = inlined_call_operand.hbm [shape: f32[8,12], index: 0, kind: input, shape index: {}]
  %s1 = inlined_call_operand.vmem [shape: f32[8,4], index: 1, kind: input, shape index: {}]
  %s2 = inlined_call_operand.vmem [shape: f32[12,64], index: 2, kind: input, shape index: {}]
  %s3 = inlined_call_operand.vmem [shape: f32[4,64], index: 3, kind: input, shape index: {}]
  %s4 = inlined_call_operand.vmem [shape: f32[1,64], index: 4, kind: input, shape index: {}]
  %s5 = inlined_call_operand.hbm [shape: f32[2,32,32], index: 5, kind: input, shape index: {}]
  %s6 = inlined_call_operand.vmem [shape: f32[2,32], index: 6, kind: input, shape index: {}]
  %s7 = inlined_call_operand.vmem [shape: f32[2,32], index: 7, kind: input, shape index: {}]
  %s8 = inlined_call_operand.vmem [shape: f32[2], index: 8, kind: input, shape index: {}]
  %s9 = inlined_call_operand.vmem [shape: f32[8,1], index: 9, kind: output, shape index: {0}]
  %s10 = inlined_call_operand.vmem [shape: f32[8,1], index: 10, kind: output, shape index: {1}]
  %11 = xla_tuple %s9, %s10
  %s12 = sld [smem:[#allocation0]]
  $region66: #{tpu_custom_call.1} parent=0
    _
  %s14 = ssub.s32 1, %s12
  %s15 = scalar_select 0, %s14, %s12
  $region1: #{tpu_custom_call.1} parent=0
    #allocation2 [shape = 'u8[4096]{0}', space=vmem, size = 0x1000, scoped, tag = 'input window, operand 0, single buffered']
    #allocation3 [shape = 's32[1]{0}', space=sflag, size = 0x4, scoped, tag = 'scoped memory for tpu_custom_call.1']
    #allocation4 [shape = 's32[1]{0}', space=sflag, size = 0x4, scoped, tag = 'scoped memory for tpu_custom_call.1']
    #allocation5 [shape = 'u8[32768]{0}', space=vmem, size = 0x8000, scoped, tag = 'input window, operand 5, single buffered']
    #allocation6 [shape = 's32[1]{0}', space=sflag, size = 0x4, scoped, tag = 'scoped memory for tpu_custom_call.1']
    #allocation7 [shape = 'u8[512]{0}', space=smem, size = 0x200, scoped, tag = 'input window, operand 8, single buffered']
    %16 = vsyncpa [#allocation3], 0
    %17 = vsyncpa [#allocation6], 0
    %18 = vsyncpa [#allocation4], 0
    // Predicated region
    $region2: #{tpu_custom_call.1} parent=1 // pred_check
      _
    $region3: #{tpu_custom_call.1} parent=1 // pred_check_branch
      %20 = sbr.rel (0) target = $region5
    $region4: #{tpu_custom_call.1} parent=1 // pred_region
      %s22 = ssub.s32 128, 128
      %23 = vsyncadd [#allocation3], %s22
      %s25 = sshll.u32 [#allocation2], 4
      %s26 = int_to_ptr.vmem [resolvable:$true] %s25
      %28 = dma.hbm_to_vmem [thread:$0]  %s0, 128, %s26, [#allocation3]
    $region5: #{tpu_custom_call.1} parent=1 // pred_fallthru
      _
    // Predicated region
    $region6: #{tpu_custom_call.1} parent=1 // pred_check
      _
    $region7: #{tpu_custom_call.1} parent=1 // pred_check_branch
      %30 = sbr.rel (0) target = $region9
    $region8: #{tpu_custom_call.1} parent=1 // pred_region
      _
    $region9: #{tpu_custom_call.1} parent=1 // pred_fallthru
      _
    // Predicated region
    $region10: #{tpu_custom_call.1} parent=1 // pred_check
      _
    $region11: #{tpu_custom_call.1} parent=1 // pred_check_branch
      %32 = sbr.rel (0) target = $region13
    $region12: #{tpu_custom_call.1} parent=1 // pred_region
      _
    $region13: #{tpu_custom_call.1} parent=1 // pred_fallthru
      _
    // Predicated region
    $region14: #{tpu_custom_call.1} parent=1 // pred_check
      _
    $region15: #{tpu_custom_call.1} parent=1 // pred_check_branch
      %34 = sbr.rel (0) target = $region17
    $region16: #{tpu_custom_call.1} parent=1 // pred_region
      _
    $region17: #{tpu_custom_call.1} parent=1 // pred_fallthru
      _
    // Predicated region
    $region18: #{tpu_custom_call.1} parent=1 // pred_check
      _
    $region19: #{tpu_custom_call.1} parent=1 // pred_check_branch
      %36 = sbr.rel (0) target = $region21
    $region20: #{tpu_custom_call.1} parent=1 // pred_region
      _
    $region21: #{tpu_custom_call.1} parent=1 // pred_fallthru
      _
    // Predicated region
    $region22: #{tpu_custom_call.1} parent=1 // pred_check
      _
    $region23: #{tpu_custom_call.1} parent=1 // pred_check_branch
      %38 = sbr.rel (0) target = $region25
    $region24: #{tpu_custom_call.1} parent=1 // pred_region
      %s40 = ssub.s32 1024, 1024
      %41 = vsyncadd [#allocation6], %s40
      %s42 = sshll.u32 [#allocation5], 4
      %s43 = int_to_ptr.vmem [resolvable:$true] %s42
      %48 = dma.hbm_to_vmem [thread:$0]  %s5, 1024, %s43, [#allocation6], 128, 128, 8
    $region25: #{tpu_custom_call.1} parent=1 // pred_fallthru
      _
    // Predicated region
    $region26: #{tpu_custom_call.1} parent=1 // pred_check
      _
    $region27: #{tpu_custom_call.1} parent=1 // pred_check_branch
      %50 = sbr.rel (0) target = $region29
    $region28: #{tpu_custom_call.1} parent=1 // pred_region
      _
    $region29: #{tpu_custom_call.1} parent=1 // pred_fallthru
      _
    // Predicated region
    $region30: #{tpu_custom_call.1} parent=1 // pred_check
      _
    $region31: #{tpu_custom_call.1} parent=1 // pred_check_branch
      %52 = sbr.rel (0) target = $region33
    $region32: #{tpu_custom_call.1} parent=1 // pred_region
      _
    $region33: #{tpu_custom_call.1} parent=1 // pred_fallthru
      _
    // Predicated region
    $region34: #{tpu_custom_call.1} parent=1 // pred_check
      _
    $region35: #{tpu_custom_call.1} parent=1 // pred_check_branch
      %54 = sbr.rel (0) target = $region37
    $region36: #{tpu_custom_call.1} parent=1 // pred_region
      %s56 = ssub.s32 16, 16
      %57 = vsyncadd [#allocation4], %s56
      %s59 = sshll.u32 %s8, 4
      %s60 = int_to_ptr.vmem [resolvable:$true] %s59
      %62 = dma.vmem_to_smem %s60, 16, [#allocation7], [#allocation4]
    $region37: #{tpu_custom_call.1} parent=1 // pred_fallthru
      _
    // Predicated region
    $region38: #{tpu_custom_call.1} parent=1 // pred_check
      _
    $region39: #{tpu_custom_call.1} parent=1 // pred_check_branch
      %64 = sbr.rel (0) target = $region41
    $region40: #{tpu_custom_call.1} parent=1 // pred_region
      %65 = dma.done [#allocation3], 128
    $region41: #{tpu_custom_call.1} parent=1 // pred_fallthru
      _
    // Predicated region
    $region42: #{tpu_custom_call.1} parent=1 // pred_check
      _
    $region43: #{tpu_custom_call.1} parent=1 // pred_check_branch
      %67 = sbr.rel (0) target = $region45
    $region44: #{tpu_custom_call.1} parent=1 // pred_region
      %68 = dma.done [#allocation6], 1024
    $region45: #{tpu_custom_call.1} parent=1 // pred_fallthru
      _
    // Predicated region
    $region46: #{tpu_custom_call.1} parent=1 // pred_check
      _
    $region47: #{tpu_custom_call.1} parent=1 // pred_check_branch
      %70 = sbr.rel (0) target = $region49
    $region48: #{tpu_custom_call.1} parent=1 // pred_region
      %71 = dma.done [#allocation4], 16
    $region49: #{tpu_custom_call.1} parent=1 // pred_fallthru
      _
    %72 = sfence
    %v73 = vld [vmem:[#allocation2] sm:$0xff]
    %v74 = vld [vmem:[%s1] sm:$0xff]
    %v75 = vld [vmem:[%s2] sm:$0xff]
    %v76 = vld [vmem:[%s2 + $0x8] sm:$0xf]
    %v77 = vld [vmem:[%s3] sm:$0xf]
    %vm78 = vcmask 31744
    %v80 = vsel %vm78, %v74, 0
    %vm82 = vcmask 1043456
    %v84 = vsel %vm82, %v77, 0
    %86 = vmatprep.subr.mxu0 0.0
    %87 = vmatpush1.msra.mxu0 %v84
    %88 = vmatprep.subr.mxu0 0.0
    %89 = vmatpush1.msra.mxu0 0.0
    %90 = vmatprep.subr.mxu0 0.0
    %91 = vmatpush1.msra.mxu0 0.0
    %92 = vmatprep.subr.mxu0 0.0
    %93 = vmatpush1.msra.mxu0 0.0
    %94 = vmatprep.subr.mxu0 0.0
    %95 = vmatpush1.msra.mxu0 0.0
    %96 = vmatprep.subr.mxu0 0.0
    %97 = vmatpush1.msra.mxu0 0.0
    %98 = vmatprep.subr.mxu0 0.0
    %99 = vmatpush1.msra.mxu0 0.0
    %100 = vmatprep.subr.mxu0 0.0
    %101 = vmatpush1.msra.mxu0 0.0
    %102 = vmatprep.subr.mxu0 0.0
    %103 = vmatpush1.msra.mxu0 0.0
    %104 = vmatprep.subr.mxu0 0.0
    %105 = vmatpush1.msra.mxu0 0.0
    %106 = vmatprep.subr.mxu0 0.0
    %107 = vmatpush1.msra.mxu0 0.0
    %108 = vmatprep.subr.mxu0 0.0
    %109 = vmatpush1.msra.mxu0 0.0
    %110 = vmatprep.subr.mxu0 0.0
    %111 = vmatpush1.msra.mxu0 0.0
    %112 = vmatprep.subr.mxu0 0.0
    %113 = vmatpush1.msra.mxu0 0.0
    %114 = vmatprep.subr.mxu0 0.0
    %115 = vmatpush1.msra.mxu0 0.0
    %116 = vmatprep.subr.mxu0 0.0
    %117 = vmatpush1.msra.mxu0 0.0
    %118 = vmatprep.subr.mxu0 0.0
    %119 = vmatpush1.msra.mxu0 0.0
    %120 = vmatprep.subr.mxu0 0.0
    %121 = vmatpush1.msra.mxu0 0.0
    %122 = vmatprep.subr.mxu0 0.0
    %123 = vmatpush1.msra.mxu0 0.0
    %124 = vmatprep.subr.mxu0 0.0
    %125 = vmatpush1.msra.mxu0 0.0
    %126 = vmatprep.subr.mxu0 0.0
    %127 = vmatpush1.msra.mxu0 0.0
    %128 = vmatprep.subr.mxu0 0.0
    %129 = vmatpush1.msra.mxu0 0.0
    %130 = vmatprep.subr.mxu0 0.0
    %131 = vmatpush1.msra.mxu0 0.0
    %132 = vmatprep.subr.mxu0 0.0
    %133 = vmatpush1.msra.mxu0 0.0
    %134 = vmatprep.subr.mxu0 0.0
    %135 = vmatpush1.msra.mxu0 0.0
    %136 = vmatprep.subr.mxu0 0.0
    %137 = vmatpush1.msra.mxu0 0.0
    %138 = vmatprep.subr.mxu0 0.0
    %139 = vmatpush1.msra.mxu0 0.0
    %140 = vmatprep.subr.mxu0 0.0
    %141 = vmatpush1.msra.mxu0 0.0
    %142 = vmatprep.subr.mxu0 0.0
    %143 = vmatpush1.msra.mxu0 0.0
    %144 = vmatprep.subr.mxu0 0.0
    %145 = vmatpush1.msra.mxu0 0.0
    %146 = vmatprep.subr.mxu0 0.0
    %147 = vmatpush1.msra.mxu0 0.0
    %148 = vmatprep.subr.mxu0 0.0
    %149 = vmatpush1.msra.mxu0 0.0
    %150 = vmatprep.mubr.f32.mxu0 0.0
    %151 = vmatmul.mubr.f32.gmra.mrb[0].mxu0 %v80
    %v152 = vpop.f32.mrb[0].mxu0
    %v153 = vadd.f32 0.0, %v152
    %v154 = vpop.f32.mrb[0].mxu0
    %155 = vdwg.mxu0
    %vm156 = vcmask 97280
    %v158 = vsel %vm156, %v73, 0
    %v161 = vsel %vm82, %v76, 0
    %163 = vmatprep.subr.mxu0 0.0
    %164 = vmatpush1.msra.mxu0 %v75
    %165 = vmatprep.subr.mxu0 0.0
    %166 = vmatpush1.msra.mxu0 %v161
    %167 = vmatprep.subr.mxu0 0.0
    %168 = vmatpush1.msra.mxu0 0.0
    %169 = vmatprep.subr.mxu0 0.0
    %170 = vmatpush1.msra.mxu0 0.0
    %171 = vmatprep.subr.mxu0 0.0
    %172 = vmatpush1.msra.mxu0 0.0
    %173 = vmatprep.subr.mxu0 0.0
    %174 = vmatpush1.msra.mxu0 0.0
    %175 = vmatprep.subr.mxu0 0.0
    %176 = vmatpush1.msra.mxu0 0.0
    %177 = vmatprep.subr.mxu0 0.0
    %178 = vmatpush1.msra.mxu0 0.0
    %179 = vmatprep.subr.mxu0 0.0
    %180 = vmatpush1.msra.mxu0 0.0
    %181 = vmatprep.subr.mxu0 0.0
    %182 = vmatpush1.msra.mxu0 0.0
    %183 = vmatprep.subr.mxu0 0.0
    %184 = vmatpush1.msra.mxu0 0.0
    %185 = vmatprep.subr.mxu0 0.0
    %186 = vmatpush1.msra.mxu0 0.0
    %187 = vmatprep.subr.mxu0 0.0
    %188 = vmatpush1.msra.mxu0 0.0
    %189 = vmatprep.subr.mxu0 0.0
    %190 = vmatpush1.msra.mxu0 0.0
    %191 = vmatprep.subr.mxu0 0.0
    %192 = vmatpush1.msra.mxu0 0.0
    %193 = vmatprep.subr.mxu0 0.0
    %194 = vmatpush1.msra.mxu0 0.0
    %195 = vmatprep.subr.mxu0 0.0
    %196 = vmatpush1.msra.mxu0 0.0
    %197 = vmatprep.subr.mxu0 0.0
    %198 = vmatpush1.msra.mxu0 0.0
    %199 = vmatprep.subr.mxu0 0.0
    %200 = vmatpush1.msra.mxu0 0.0
    %201 = vmatprep.subr.mxu0 0.0
    %202 = vmatpush1.msra.mxu0 0.0
    %203 = vmatprep.subr.mxu0 0.0
    %204 = vmatpush1.msra.mxu0 0.0
    %205 = vmatprep.subr.mxu0 0.0
    %206 = vmatpush1.msra.mxu0 0.0
    %207 = vmatprep.subr.mxu0 0.0
    %208 = vmatpush1.msra.mxu0 0.0
    %209 = vmatprep.subr.mxu0 0.0
    %210 = vmatpush1.msra.mxu0 0.0
    %211 = vmatprep.subr.mxu0 0.0
    %212 = vmatpush1.msra.mxu0 0.0
    %213 = vmatprep.subr.mxu0 0.0
    %214 = vmatpush1.msra.mxu0 0.0
    %215 = vmatprep.subr.mxu0 0.0
    %216 = vmatpush1.msra.mxu0 0.0
    %217 = vmatprep.subr.mxu0 0.0
    %218 = vmatpush1.msra.mxu0 0.0
    %219 = vmatprep.subr.mxu0 0.0
    %220 = vmatpush1.msra.mxu0 0.0
    %221 = vmatprep.subr.mxu0 0.0
    %222 = vmatpush1.msra.mxu0 0.0
    %223 = vmatprep.subr.mxu0 0.0
    %224 = vmatpush1.msra.mxu0 0.0
    %225 = vmatprep.subr.mxu0 0.0
    %226 = vmatpush1.msra.mxu0 0.0
    %227 = vmatprep.mubr.f32.mxu0 0.0
    %228 = vmatmul.mubr.f32.gmra.mrb[0].mxu0 %v158
    %v229 = vpop.f32.mrb[0].mxu0
    %v230 = vadd.f32 %v153, %v229
    %v231 = vpop.f32.mrb[0].mxu0
    %232 = vdwg.mxu0
    %v233 = vld [vmem:[%s4] sm:$0x1]
    %v235 = vlaneseq
    %v236 = vshrl.u32 %v235, 7
    %v237 = vsub.s32 0, %v236
    %v238 = vrot.slane %v233, %v237
    %v240 = vadd.f32 %v230, %v238
    %v241 = vmax.f32 %v240, 0.0
    %v242 = vld [vmem:[#allocation5] sm:$0xff]
    %v243 = vld [vmem:[#allocation5 + $0x8] sm:$0xff]
    %v244 = vld [vmem:[#allocation5 + $0x10] sm:$0xff]
    %v245 = vld [vmem:[#allocation5 + $0x18] sm:$0xff]
    %v246 = vld [vmem:[%s6] sm:$0x1]
    %v247 = vlaneseq
    %v248 = vshrl.u32 %v247, 7
    %v249 = vsub.s32 0, %v248
    %v250 = vrot.slane %v246, %v249
    %vm251 = vcmask 261120
    %v253 = vsel %vm251, %v241, 0
    %255 = vmatprep.subr.mxu0 0.0
    %256 = vmatpush1.msra.mxu0 %v242
    %257 = vmatprep.subr.mxu0 0.0
    %258 = vmatpush1.msra.mxu0 %v243
    %259 = vmatprep.subr.mxu0 0.0
    %260 = vmatpush1.msra.mxu0 %v244
    %261 = vmatprep.subr.mxu0 0.0
    %262 = vmatpush1.msra.mxu0 %v245
    %263 = vmatprep.subr.mxu0 0.0
    %264 = vmatpush1.msra.mxu0 0.0
    %265 = vmatprep.subr.mxu0 0.0
    %266 = vmatpush1.msra.mxu0 0.0
    %267 = vmatprep.subr.mxu0 0.0
    %268 = vmatpush1.msra.mxu0 0.0
    %269 = vmatprep.subr.mxu0 0.0
    %270 = vmatpush1.msra.mxu0 0.0
    %271 = vmatprep.subr.mxu0 0.0
    %272 = vmatpush1.msra.mxu0 0.0
    %273 = vmatprep.subr.mxu0 0.0
    %274 = vmatpush1.msra.mxu0 0.0
    %275 = vmatprep.subr.mxu0 0.0
    %276 = vmatpush1.msra.mxu0 0.0
    %277 = vmatprep.subr.mxu0 0.0
    %278 = vmatpush1.msra.mxu0 0.0
    %279 = vmatprep.subr.mxu0 0.0
    %280 = vmatpush1.msra.mxu0 0.0
    %281 = vmatprep.subr.mxu0 0.0
    %282 = vmatpush1.msra.mxu0 0.0
    %283 = vmatprep.subr.mxu0 0.0
    %284 = vmatpush1.msra.mxu0 0.0
    %285 = vmatprep.subr.mxu0 0.0
    %286 = vmatpush1.msra.mxu0 0.0
    %287 = vmatprep.subr.mxu0 0.0
    %288 = vmatpush1.msra.mxu0 0.0
    %289 = vmatprep.subr.mxu0 0.0
    %290 = vmatpush1.msra.mxu0 0.0
    %291 = vmatprep.subr.mxu0 0.0
    %292 = vmatpush1.msra.mxu0 0.0
    %293 = vmatprep.subr.mxu0 0.0
    %294 = vmatpush1.msra.mxu0 0.0
    %295 = vmatprep.subr.mxu0 0.0
    %296 = vmatpush1.msra.mxu0 0.0
    %297 = vmatprep.subr.mxu0 0.0
    %298 = vmatpush1.msra.mxu0 0.0
    %299 = vmatprep.subr.mxu0 0.0
    %300 = vmatpush1.msra.mxu0 0.0
    %301 = vmatprep.subr.mxu0 0.0
    %302 = vmatpush1.msra.mxu0 0.0
    %303 = vmatprep.subr.mxu0 0.0
    %304 = vmatpush1.msra.mxu0 0.0
    %305 = vmatprep.subr.mxu0 0.0
    %306 = vmatpush1.msra.mxu0 0.0
    %307 = vmatprep.subr.mxu0 0.0
    %308 = vmatpush1.msra.mxu0 0.0
    %309 = vmatprep.subr.mxu0 0.0
    %310 = vmatpush1.msra.mxu0 0.0
    %311 = vmatprep.subr.mxu0 0.0
    %312 = vmatpush1.msra.mxu0 0.0
    %313 = vmatprep.subr.mxu0 0.0
    %314 = vmatpush1.msra.mxu0 0.0
    %315 = vmatprep.subr.mxu0 0.0
    %316 = vmatpush1.msra.mxu0 0.0
    %317 = vmatprep.subr.mxu0 0.0
    %318 = vmatpush1.msra.mxu0 0.0
    %319 = vmatprep.mubr.f32.mxu0 0.0
    %320 = vmatmul.mubr.f32.gmra.mrb[0].mxu0 %v253
    %v321 = vpop.f32.mrb[0].mxu0
    %v322 = vadd.f32 %v250, %v321
    %v323 = vpop.f32.mrb[0].mxu0
    %324 = vdwg.mxu0
    %v325 = vmax.f32 %v322, 0.0
    %v326 = vld [vmem:[%s7] sm:$0x1]
    %v327 = vlaneseq
    %v328 = vshrl.u32 %v327, 7
    %v329 = vsub.s32 0, %v328
    %v330 = vrot.slane %v326, %v329
    %v331 = vmul.f32 %v325, %v330
    %v332 = vsel %vm251, %v331, 0.0
    %333 = vadd.xlane.f32.xlu0 %v332
    %v334 = vpop.xlane.xlu0 %333
    %s335 = sld [smem:[#allocation7]]
    %v336 = vstv %s335
    %v337 = vadd.f32 %v334, %v336
    %vm338 = vcmask 7168
    %339 = vst.msk [vmem:[%s9] sm:$0xff] %vm338, %v337
    %s340 = scalar_lea.vmem [#allocation5], 32
    %v341 = vld [vmem:[%s340] sm:$0xff]
    %v342 = vld [vmem:[%s340 + $0x8] sm:$0xff]
    %v343 = vld [vmem:[%s340 + $0x10] sm:$0xff]
    %v344 = vld [vmem:[%s340 + $0x18] sm:$0xff]
    %v345 = vld [vmem:[%s6 + $0x1] sm:$0x1]
    %v346 = vlaneseq
    %v347 = vshrl.u32 %v346, 7
    %v348 = vsub.s32 0, %v347
    %v349 = vrot.slane %v345, %v348
    %350 = vrot.lane.b32.xlu0 %v241, 96
    %v351 = vpop.permute.xlu0 %350
    %v352 = vsel %vm251, %v351, 0
    %354 = vmatprep.subr.mxu0 0.0
    %355 = vmatpush1.msra.mxu0 %v341
    %356 = vmatprep.subr.mxu0 0.0
    %357 = vmatpush1.msra.mxu0 %v342
    %358 = vmatprep.subr.mxu0 0.0
    %359 = vmatpush1.msra.mxu0 %v343
    %360 = vmatprep.subr.mxu0 0.0
    %361 = vmatpush1.msra.mxu0 %v344
    %362 = vmatprep.subr.mxu0 0.0
    %363 = vmatpush1.msra.mxu0 0.0
    %364 = vmatprep.subr.mxu0 0.0
    %365 = vmatpush1.msra.mxu0 0.0
    %366 = vmatprep.subr.mxu0 0.0
    %367 = vmatpush1.msra.mxu0 0.0
    %368 = vmatprep.subr.mxu0 0.0
    %369 = vmatpush1.msra.mxu0 0.0
    %370 = vmatprep.subr.mxu0 0.0
    %371 = vmatpush1.msra.mxu0 0.0
    %372 = vmatprep.subr.mxu0 0.0
    %373 = vmatpush1.msra.mxu0 0.0
    %374 = vmatprep.subr.mxu0 0.0
    %375 = vmatpush1.msra.mxu0 0.0
    %376 = vmatprep.subr.mxu0 0.0
    %377 = vmatpush1.msra.mxu0 0.0
    %378 = vmatprep.subr.mxu0 0.0
    %379 = vmatpush1.msra.mxu0 0.0
    %380 = vmatprep.subr.mxu0 0.0
    %381 = vmatpush1.msra.mxu0 0.0
    %382 = vmatprep.subr.mxu0 0.0
    %383 = vmatpush1.msra.mxu0 0.0
    %384 = vmatprep.subr.mxu0 0.0
    %385 = vmatpush1.msra.mxu0 0.0
    %386 = vmatprep.subr.mxu0 0.0
    %387 = vmatpush1.msra.mxu0 0.0
    %388 = vmatprep.subr.mxu0 0.0
    %389 = vmatpush1.msra.mxu0 0.0
    %390 = vmatprep.subr.mxu0 0.0
    %391 = vmatpush1.msra.mxu0 0.0
    %392 = vmatprep.subr.mxu0 0.0
    %393 = vmatpush1.msra.mxu0 0.0
    %394 = vmatprep.subr.mxu0 0.0
    %395 = vmatpush1.msra.mxu0 0.0
    %396 = vmatprep.subr.mxu0 0.0
    %397 = vmatpush1.msra.mxu0 0.0
    %398 = vmatprep.subr.mxu0 0.0
    %399 = vmatpush1.msra.mxu0 0.0
    %400 = vmatprep.subr.mxu0 0.0
    %401 = vmatpush1.msra.mxu0 0.0
    %402 = vmatprep.subr.mxu0 0.0
    %403 = vmatpush1.msra.mxu0 0.0
    %404 = vmatprep.subr.mxu0 0.0
    %405 = vmatpush1.msra.mxu0 0.0
    %406 = vmatprep.subr.mxu0 0.0
    %407 = vmatpush1.msra.mxu0 0.0
    %408 = vmatprep.subr.mxu0 0.0
    %409 = vmatpush1.msra.mxu0 0.0
    %410 = vmatprep.subr.mxu0 0.0
    %411 = vmatpush1.msra.mxu0 0.0
    %412 = vmatprep.subr.mxu0 0.0
    %413 = vmatpush1.msra.mxu0 0.0
    %414 = vmatprep.subr.mxu0 0.0
    %415 = vmatpush1.msra.mxu0 0.0
    %416 = vmatprep.subr.mxu0 0.0
    %417 = vmatpush1.msra.mxu0 0.0
    %418 = vmatprep.mubr.f32.mxu0 0.0
    %419 = vmatmul.mubr.f32.gmra.mrb[0].mxu0 %v352
    %v420 = vpop.f32.mrb[0].mxu0
    %v421 = vadd.f32 %v349, %v420
    %v422 = vpop.f32.mrb[0].mxu0
    %423 = vdwg.mxu0
    %v424 = vmax.f32 %v421, 0.0
    %v425 = vld [vmem:[%s7 + $0x1] sm:$0x1]
    %v426 = vlaneseq
    %v427 = vshrl.u32 %v426, 7
    %v428 = vsub.s32 0, %v427
    %v429 = vrot.slane %v425, %v428
    %v430 = vmul.f32 %v424, %v429
    %v431 = vsel %vm251, %v430, 0.0
    %432 = vadd.xlane.f32.xlu0 %v431
    %v433 = vpop.xlane.xlu0 %432
    %s434 = sld [smem:[#allocation7 + $0x1]]
    %v435 = vstv %s434
    %v436 = vadd.f32 %v433, %v435
    %437 = vst.msk [vmem:[%s10] sm:$0xff] %vm338, %v436
    // Predicated region
    $region50: #{tpu_custom_call.1} parent=1 // pred_check
      _
    $region51: #{tpu_custom_call.1} parent=1 // pred_check_branch
      %439 = sbr.rel (0) target = $region53
    $region52: #{tpu_custom_call.1} parent=1 // pred_region
      _
    $region53: #{tpu_custom_call.1} parent=1 // pred_fallthru
      _
    // Predicated region
    $region54: #{tpu_custom_call.1} parent=1 // pred_check
      _
    $region55: #{tpu_custom_call.1} parent=1 // pred_check_branch
      %441 = sbr.rel (0) target = $region57
    $region56: #{tpu_custom_call.1} parent=1 // pred_region
      _
    $region57: #{tpu_custom_call.1} parent=1 // pred_fallthru
      _
    // Predicated region
    $region58: #{tpu_custom_call.1} parent=1 // pred_check
      _
    $region59: #{tpu_custom_call.1} parent=1 // pred_check_branch
      %443 = sbr.rel (0) target = $region61
    $region60: #{tpu_custom_call.1} parent=1 // pred_region
      _
    $region61: #{tpu_custom_call.1} parent=1 // pred_fallthru
      _
    // Predicated region
    $region62: #{tpu_custom_call.1} parent=1 // pred_check
      _
    $region63: #{tpu_custom_call.1} parent=1 // pred_check_branch
      %445 = sbr.rel (0) target = $region65
    $region64: #{tpu_custom_call.1} parent=1 // pred_region
      _
    $region65: #{tpu_custom_call.1} parent=1 // pred_fallthru
      _
    %446 = vsyncpa [#allocation3], 1
    %447 = vsyncpa [#allocation6], 1
    %448 = vsyncpa [#allocation4], 1

</llo_original>
